<compile_context>
chip_gen: v7x
topology: tpu7x:2x2x1
jax: 0.10.0
libtpu: 0.0.40
codegen_flags: <defaults>
</compile_context>

<pallas_src>
import functools

import jax
import jax.numpy as jnp
from jax.experimental import pallas as pl
from jax.experimental.pallas import tpu as pltpu


def _quant_kernel(clip_val_ref, clip_valn_ref, x_ref, o_ref, sums_ref, *,
                  num_bits, num_bits_test, dequantize, mean_aligned,
                  total, needs_mask, num_row_blocks):
    """Pass 0 accumulates global sums (m1 = mean(x), m2 = mean(deq high-bit),
    m3 = mean(deq low-bit)) in SMEM; pass 1 recomputes the elementwise
    quant/dequant and applies the mean-ratio scaling.  When dequantize=False
    the grid has a single pass and only the low-bit levels are written."""
    p = pl.program_id(0)   # pass index
    i = pl.program_id(1)   # row-tile index
    TR, L = x_ref.shape

    cv = clip_val_ref[0]
    cvn = clip_valn_ref[0]

    # asymmetric_linear_quantization_params(num_bits, clip_valn, clip_val,
    #                                       integral_zero_point=False, signed=False)
    n = jnp.float32(2 ** num_bits - 1)
    sat_min = jnp.minimum(cvn, jnp.float32(0.0))
    sat_max = jnp.maximum(cv, jnp.float32(0.0))
    diff = sat_max - sat_min
    diff = jnp.where(diff == 0.0, n, diff)
    scale = n / diff
    inv_scale = jnp.float32(1.0) / scale       # scalar path; avoids vector divides
    zero_point = scale * sat_min

    x = x_ref[...].astype(jnp.float32)
    # torch.where clamp (clip_val / clip_valn are tensors in the reference)
    clipped = jnp.where(x > cv, cv, x)
    clipped = jnp.where(clipped < cvn, cvn, clipped)

    out_bit_h = jnp.round(scale * clipped - zero_point)      # linear_quantize

    nbt = num_bits if num_bits_test == -1 else num_bits_test
    d = int(2 ** (num_bits - nbt))
    if d != 1:
        out_bit_l = jnp.floor(out_bit_h * jnp.float32(1.0 / d)) * jnp.float32(d)
    else:
        out_bit_l = out_bit_h

    if not dequantize:
        # Single-pass grid: just emit the low-bit integer levels.
        o_ref[...] = out_bit_l.astype(o_ref.dtype)
        return

    deq_l = (out_bit_l + zero_point) * inv_scale             # m3 source / output

    @pl.when(jnp.logical_and(p == 0, i == 0))
    def _():
        sums_ref[0] = jnp.float32(0.0)
        sums_ref[1] = jnp.float32(0.0)
        sums_ref[2] = jnp.float32(0.0)

    @pl.when(p == 0)
    def _():
        deq_h = (out_bit_h + zero_point) * inv_scale         # m2 source (pass 0 only)

        def accum(mask=None):
            if mask is None:
                sums_ref[0] = sums_ref[0] + jnp.sum(x)
                sums_ref[1] = sums_ref[1] + jnp.sum(deq_h)
                sums_ref[2] = sums_ref[2] + jnp.sum(deq_l)
            else:
                z = jnp.zeros_like(x)
                sums_ref[0] = sums_ref[0] + jnp.sum(jnp.where(mask, x, z))
                sums_ref[1] = sums_ref[1] + jnp.sum(jnp.where(mask, deq_h, z))
                sums_ref[2] = sums_ref[2] + jnp.sum(jnp.where(mask, deq_l, z))

        if needs_mask:
            # Only the last block can contain padded / out-of-bounds elements.
            last = num_row_blocks - 1
            base = last * TR * L   # compile-time constant

            @pl.when(i != last)
            def _():
                accum()

            @pl.when(i == last)
            def _():
                row = jax.lax.broadcasted_iota(jnp.int32, (TR, L), 0)
                col = jax.lax.broadcasted_iota(jnp.int32, (TR, L), 1)
                accum(mask=(base + row * L + col) < total)
        else:
            accum()
        # NOTE: no output write in pass 0 (output block stays resident, no HBM writeback)

    @pl.when(p == 1)
    def _():
        inv_total = jnp.float32(1.0 / total)
        m1 = sums_ref[0] * inv_total
        m2 = sums_ref[1] * inv_total
        m3 = sums_ref[2] * inv_total
        numer = m1 if mean_aligned else m2
        ratio = jnp.where(m3 != 0.0, numer / m3, jnp.float32(1.0))
        o_ref[...] = (deq_l * ratio).astype(o_ref.dtype)


def learned_twosided_clipped_linear_quantization2(
        x, clip_val, clip_valn, *, num_bits, num_bits_test=-1,
        dequantize=True, mean_aligned=False, row_tile=1024):
    """JAX/Pallas equivalent of LearnedTwosidedClippedLinearQuantization2.forward."""
    orig_shape = x.shape
    orig_dtype = x.dtype
    clip_val = jnp.asarray(clip_val, jnp.float32).reshape(-1)[:1]
    clip_valn = jnp.asarray(clip_valn, jnp.float32).reshape(-1)[:1]

    if num_bits == 32:
        return x
    if num_bits == 1:
        # TODO(synk): trivial 1-bit (torch.sign) path kept in plain JAX.
        return jnp.sign(x).astype(orig_dtype)

    total = int(x.size)
    assert total < 2 ** 31, "int32 flat index would overflow"
    lane = 128

    # Keep bf16/f32 inputs in their native dtype for DMA; upcast inside the kernel.
    if x.dtype == jnp.float32 or x.dtype == jnp.bfloat16:
        io_dtype = x.dtype
    else:
        io_dtype = jnp.float32

    xf = x.reshape(-1).astype(io_dtype)          # free reshape / no-op cast in common case

    rem = total % lane
    if rem != 0:
        # TODO(synk): ragged tail (total % 128 != 0) requires one wrapper-side pad copy.
        xf = jnp.concatenate([xf, jnp.zeros((lane - rem,), io_dtype)])
    rows = xf.shape[0] // lane
    x2 = xf.reshape(rows, lane)

    # Tile selection: big (512..2048-row) tiles amortize per-step overhead; block
    # row dim must be a multiple of 8 unless it equals the full dimension.
    tile = min(int(row_tile), rows)
    if tile < rows:
        tile = max(8, (tile // 8) * 8)
    num_row_blocks = (rows + tile - 1) // tile
    # Padding/garbage elements only exist if the full blocks over-cover `total`.
    needs_mask = total < num_row_blocks * tile * lane

    num_passes = 2 if dequantize else 1
    if dequantize:
        out_index = lambda p, i: (i * p, 0)      # output resident during pass 0
    else:
        out_index = lambda p, i: (i, 0)

    kernel = functools.partial(
        _quant_kernel, num_bits=num_bits, num_bits_test=num_bits_test,
        dequantize=dequantize, mean_aligned=mean_aligned, total=total,
        needs_mask=needs_mask, num_row_blocks=num_row_blocks)

    elem_bytes = jnp.dtype(io_dtype).itemsize
    cost = pl.CostEstimate(
        flops=int(12 * total * num_passes),
        transcendentals=0,
        bytes_accessed=int((num_passes + 1) * rows * lane * elem_bytes))

    out2 = pl.pallas_call(
        kernel,
        out_shape=jax.ShapeDtypeStruct((rows, lane), io_dtype),
        grid_spec=pltpu.PrefetchScalarGridSpec(
            num_scalar_prefetch=0,
            grid=(num_passes, num_row_blocks),
            in_specs=[
                pl.BlockSpec(memory_space=pltpu.MemorySpace.SMEM),  # clip_val (1,)
                pl.BlockSpec(memory_space=pltpu.MemorySpace.SMEM),  # clip_valn (1,)
                pl.BlockSpec((tile, lane), lambda p, i: (i, 0)),
            ],
            out_specs=pl.BlockSpec((tile, lane), out_index),
            scratch_shapes=[pltpu.SMEM((3,), jnp.float32)],
        ),
        compiler_params=pltpu.CompilerParams(
            dimension_semantics=("arbitrary", "arbitrary"),
            vmem_limit_bytes=32 * 1024 * 1024),
        cost_estimate=cost,
    )(clip_val, clip_valn, x2)

    if rem != 0:
        out = out2.reshape(-1)[:total].reshape(orig_shape)
    else:
        out = out2.reshape(orig_shape)
    return out.astype(orig_dtype)


def _reference(x, clip_val, clip_valn, num_bits, num_bits_test, dequantize, mean_aligned):
    """Pure-JAX transcription of the PyTorch forward, used for verification."""
    x = x.astype(jnp.float32)
    cv = jnp.asarray(clip_val, jnp.float32).reshape(())
    cvn = jnp.asarray(clip_valn, jnp.float32).reshape(())
    m1 = x.mean()
    n = jnp.float32(2 ** num_bits - 1)
    sat_min = jnp.minimum(cvn, 0.0)
    sat_max = jnp.maximum(cv, 0.0)
    diff = sat_max - sat_min
    diff = jnp.where(diff == 0.0, n, diff)
    scale = n / diff
    zp = scale * sat_min
    out = jnp.where(x > cv, cv, x)
    out = jnp.where(out < cvn, cvn, out)
    out_bit_h = jnp.round(scale * out - zp)
    m2 = ((out_bit_h + zp) / scale).mean()
    nbt = num_bits if num_bits_test == -1 else num_bits_test
    d = int(2 ** (num_bits - nbt))
    out_bit_l = jnp.floor(out_bit_h / d) * d if d != 1 else out_bit_h
    if dequantize:
        out = (out_bit_l + zp) / scale
        m3 = out.mean()
        numer = m1 if mean_aligned else m2
        out = jnp.where(m3 != 0.0, out * numer / m3, out)
    else:
        out = out_bit_l
    return out


if __name__ == "__main__":
    clip_val = jnp.array([2.0], jnp.float32)
    clip_valn = jnp.array([-2.0], jnp.float32)

    def check(shape, num_bits, num_bits_test, dequantize, mean_aligned, row_tile, kidx):
        k = jax.random.fold_in(jax.random.PRNGKey(0), kidx)
        # Offset keeps the global means well away from zero (robust ratio check).
        x = jax.random.normal(k, shape, jnp.float32) + 0.5
        out = learned_twosided_clipped_linear_quantization2(
            x, clip_val, clip_valn, num_bits=num_bits, num_bits_test=num_bits_test,
            dequantize=dequantize, mean_aligned=mean_aligned, row_tile=row_tile)
        out = jax.block_until_ready(out)
        ref = _reference(x, clip_val, clip_valn, num_bits, num_bits_test,
                         dequantize, mean_aligned)
        assert out.shape == x.shape and out.dtype == x.dtype
        assert bool(jnp.allclose(out, ref, atol=1e-5, rtol=1e-5)), \
            f"mismatch vs reference for shape={shape}"

    # Main NCHW activation path: aligned, single row block, low-bit test branch.
    check((2, 4, 16, 16), 4, 2, True, False, 1024, 0)
    # Multiple row blocks with a partial (masked) last block.
    check((2, 8, 24, 24), 4, -1, True, False, 16, 1)
    # Ragged tail (pad fallback) + mean_aligned path.
    check((3, 5, 7, 11), 8, -1, True, True, 1024, 2)
    # No-dequantize single-pass path.
    check((2, 4, 16, 16), 4, 2, False, False, 1024, 3)

    print("KERNEL_OK")
</pallas_src>

<mosaic_0001>
module attributes {stable_mosaic.version = 11 : i64} {
  func.func @_quant_kernel(%arg0: i32, %arg1: i32, %arg2: memref<1xf32, #tpu.memory_space<smem>>, %arg3: memref<1xf32, #tpu.memory_space<smem>>, %arg4: memref<16x128xf32, #tpu.memory_space<vmem>>, %arg5: memref<16x128xf32, #tpu.memory_space<vmem>>, %arg6: memref<3xf32, #tpu.memory_space<smem>>) attributes {dimension_semantics = [#tpu.dimension_semantics<arbitrary>, #tpu.dimension_semantics<arbitrary>], iteration_bounds = array<i64: 2, 1>, scalar_prefetch = 0 : i64, scratch_operands = 1 : i64, tpu.core_type = #tpu.core_type<tc>, window_params = [{transform_indices = @transform_0, window_bounds = array<i64: 1>}, {transform_indices = @transform_1, window_bounds = array<i64: 1>}, {transform_indices = @transform_2, window_bounds = array<i64: 16, 128>}, {transform_indices = @transform_3, window_bounds = array<i64: 16, 128>}]} {
    %c0 = arith.constant 0 : index
    %0 = memref.load %arg2[%c0] : memref<1xf32, #tpu.memory_space<smem>>
    %c0_0 = arith.constant 0 : index
    %1 = memref.load %arg3[%c0_0] : memref<1xf32, #tpu.memory_space<smem>>
    %cst = arith.constant 0.000000e+00 : f32
    %2 = arith.minimumf %1, %cst : f32
    %cst_1 = arith.constant 0.000000e+00 : f32
    %3 = arith.maximumf %0, %cst_1 : f32
    %4 = arith.subf %3, %2 : f32
    %cst_2 = arith.constant 0.000000e+00 : f32
    %5 = arith.cmpf oeq, %4, %cst_2 : f32
    %cst_3 = arith.constant 1.500000e+01 : f32
    %6 = arith.select %5, %cst_3, %4 : f32
    %cst_4 = arith.constant 1.500000e+01 : f32
    %7 = arith.divf %cst_4, %6 : f32
    %cst_5 = arith.constant 1.000000e+00 : f32
    %8 = arith.divf %cst_5, %7 : f32
    %9 = arith.mulf %7, %2 : f32
    %c0_6 = arith.constant 0 : index
    %c0_7 = arith.constant 0 : index
    %10 = vector.load %arg4[%c0_6, %c0_7] : memref<16x128xf32, #tpu.memory_space<vmem>>, vector<16x128xf32>
    %11 = vector.broadcast %0 : f32 to vector<16x128xf32>
    %12 = arith.cmpf ogt, %10, %11 : vector<16x128xf32>
    %13 = vector.broadcast %0 : f32 to vector<16x128xf32>
    %14 = arith.select %12, %13, %10 : vector<16x128xi1>, vector<16x128xf32>
    %15 = vector.broadcast %1 : f32 to vector<16x128xf32>
    %16 = arith.cmpf olt, %14, %15 : vector<16x128xf32>
    %17 = vector.broadcast %1 : f32 to vector<16x128xf32>
    %18 = arith.select %16, %17, %14 : vector<16x128xi1>, vector<16x128xf32>
    %19 = vector.broadcast %7 : f32 to vector<16x128xf32>
    %20 = arith.mulf %19, %18 : vector<16x128xf32>
    %21 = vector.broadcast %9 : f32 to vector<16x128xf32>
    %22 = arith.subf %20, %21 : vector<16x128xf32>
    %23 = math.roundeven %22 : vector<16x128xf32>
    %cst_8 = arith.constant 2.500000e-01 : f32
    %24 = vector.broadcast %cst_8 : f32 to vector<16x128xf32>
    %25 = arith.mulf %23, %24 : vector<16x128xf32>
    %26 = math.floor %25 : vector<16x128xf32>
    %cst_9 = arith.constant 4.000000e+00 : f32
    %27 = vector.broadcast %cst_9 : f32 to vector<16x128xf32>
    %28 = arith.mulf %26, %27 : vector<16x128xf32>
    %29 = vector.broadcast %9 : f32 to vector<16x128xf32>
    %30 = arith.addf %28, %29 : vector<16x128xf32>
    %31 = vector.broadcast %8 : f32 to vector<16x128xf32>
    %32 = arith.mulf %30, %31 : vector<16x128xf32>
    %c0_i32 = arith.constant 0 : i32
    %33 = arith.cmpi eq, %arg0, %c0_i32 : i32
    %c0_i32_10 = arith.constant 0 : i32
    %34 = arith.cmpi eq, %arg1, %c0_i32_10 : i32
    %35 = arith.andi %33, %34 : i1
    %36 = arith.extui %35 : i1 to i32
    %c0_i32_11 = arith.constant 0 : i32
    %37 = arith.cmpi ne, %36, %c0_i32_11 : i32
    scf.if %37 {
      %cst_15 = arith.constant 0.000000e+00 : f32
      %c0_16 = arith.constant 0 : index
      %44 = memref.load %arg6[%c0_16] : memref<3xf32, #tpu.memory_space<smem>>
      memref.store %cst_15, %arg6[%c0_16] : memref<3xf32, #tpu.memory_space<smem>>
      %cst_17 = arith.constant 0.000000e+00 : f32
      %c1 = arith.constant 1 : index
      %45 = memref.load %arg6[%c1] : memref<3xf32, #tpu.memory_space<smem>>
      memref.store %cst_17, %arg6[%c1] : memref<3xf32, #tpu.memory_space<smem>>
      %cst_18 = arith.constant 0.000000e+00 : f32
      %c2 = arith.constant 2 : index
      %46 = memref.load %arg6[%c2] : memref<3xf32, #tpu.memory_space<smem>>
      memref.store %cst_18, %arg6[%c2] : memref<3xf32, #tpu.memory_space<smem>>
    } else {
    }
    %c0_i32_12 = arith.constant 0 : i32
    %38 = arith.cmpi eq, %arg0, %c0_i32_12 : i32
    %39 = arith.extui %38 : i1 to i32
    %c0_i32_13 = arith.constant 0 : i32
    %40 = arith.cmpi ne, %39, %c0_i32_13 : i32
    scf.if %40 {
      %44 = vector.broadcast %9 : f32 to vector<16x128xf32>
      %45 = arith.addf %23, %44 : vector<16x128xf32>
      %46 = vector.broadcast %8 : f32 to vector<16x128xf32>
      %47 = arith.mulf %45, %46 : vector<16x128xf32>
      %c0_15 = arith.constant 0 : index
      %48 = memref.load %arg6[%c0_15] : memref<3xf32, #tpu.memory_space<smem>>
      %49 = vector.shape_cast %10 : vector<16x128xf32> to vector<1x16x128xf32>
      %cst_16 = arith.constant dense<0.000000e+00> : vector<1xf32>
      %50 = vector.multi_reduction <add>, %49, %cst_16 [1, 2] : vector<1x16x128xf32> to vector<1xf32>
      %51 = vector.shape_cast %50 : vector<1xf32> to vector<1x1x1xf32>
      %52 = vector.extract %51[0, 0, 0] : f32 from vector<1x1x1xf32>
      %53 = arith.addf %48, %52 : f32
      %c0_17 = arith.constant 0 : index
      %54 = memref.load %arg6[%c0_17] : memref<3xf32, #tpu.memory_space<smem>>
      memref.store %53, %arg6[%c0_17] : memref<3xf32, #tpu.memory_space<smem>>
      %c1 = arith.constant 1 : index
      %55 = memref.load %arg6[%c1] : memref<3xf32, #tpu.memory_space<smem>>
      %56 = vector.shape_cast %47 : vector<16x128xf32> to vector<1x16x128xf32>
      %cst_18 = arith.constant dense<0.000000e+00> : vector<1xf32>
      %57 = vector.multi_reduction <add>, %56, %cst_18 [1, 2] : vector<1x16x128xf32> to vector<1xf32>
      %58 = vector.shape_cast %57 : vector<1xf32> to vector<1x1x1xf32>
      %59 = vector.extract %58[0, 0, 0] : f32 from vector<1x1x1xf32>
      %60 = arith.addf %55, %59 : f32
      %c1_19 = arith.constant 1 : index
      %61 = memref.load %arg6[%c1_19] : memref<3xf32, #tpu.memory_space<smem>>
      memref.store %60, %arg6[%c1_19] : memref<3xf32, #tpu.memory_space<smem>>
      %c2 = arith.constant 2 : index
      %62 = memref.load %arg6[%c2] : memref<3xf32, #tpu.memory_space<smem>>
      %63 = vector.shape_cast %32 : vector<16x128xf32> to vector<1x16x128xf32>
      %cst_20 = arith.constant dense<0.000000e+00> : vector<1xf32>
      %64 = vector.multi_reduction <add>, %63, %cst_20 [1, 2] : vector<1x16x128xf32> to vector<1xf32>
      %65 = vector.shape_cast %64 : vector<1xf32> to vector<1x1x1xf32>
      %66 = vector.extract %65[0, 0, 0] : f32 from vector<1x1x1xf32>
      %67 = arith.addf %62, %66 : f32
      %c2_21 = arith.constant 2 : index
      %68 = memref.load %arg6[%c2_21] : memref<3xf32, #tpu.memory_space<smem>>
      memref.store %67, %arg6[%c2_21] : memref<3xf32, #tpu.memory_space<smem>>
    } else {
    }
    %c1_i32 = arith.constant 1 : i32
    %41 = arith.cmpi eq, %arg0, %c1_i32 : i32
    %42 = arith.extui %41 : i1 to i32
    %c0_i32_14 = arith.constant 0 : i32
    %43 = arith.cmpi ne, %42, %c0_i32_14 : i32
    scf.if %43 {
      %c1 = arith.constant 1 : index
      %44 = memref.load %arg6[%c1] : memref<3xf32, #tpu.memory_space<smem>>
      %cst_15 = arith.constant 4.8828125E-4 : f32
      %45 = arith.mulf %44, %cst_15 : f32
      %c2 = arith.constant 2 : index
      %46 = memref.load %arg6[%c2] : memref<3xf32, #tpu.memory_space<smem>>
      %cst_16 = arith.constant 4.8828125E-4 : f32
      %47 = arith.mulf %46, %cst_16 : f32
      %cst_17 = arith.constant 0.000000e+00 : f32
      %48 = arith.cmpf one, %47, %cst_17 : f32
      %49 = arith.divf %45, %47 : f32
      %cst_18 = arith.constant 1.000000e+00 : f32
      %50 = arith.select %48, %49, %cst_18 : f32
      %51 = vector.broadcast %50 : f32 to vector<16x128xf32>
      %52 = arith.mulf %32, %51 : vector<16x128xf32>
      %c0_19 = arith.constant 0 : index
      %c0_20 = arith.constant 0 : index
      %53 = vector.load %arg5[%c0_19, %c0_20] : memref<16x128xf32, #tpu.memory_space<vmem>>, vector<16x128xf32>
      tpu.vector_store %arg5[%c0_19, %c0_20], %52 {strides = array<i32>} : memref<16x128xf32, #tpu.memory_space<vmem>>, vector<16x128xf32>,
    } else {
    }
    return
  }
  func.func @transform_0(%arg0: i32, %arg1: i32) -> i32 {
    %c0_i32 = arith.constant 0 : i32
    %c0_i32_0 = arith.constant 0 : i32
    return %c0_i32 : i32
  }
  func.func @transform_1(%arg0: i32, %arg1: i32) -> i32 {
    %c0_i32 = arith.constant 0 : i32
    %c0_i32_0 = arith.constant 0 : i32
    return %c0_i32 : i32
  }
  func.func @transform_2(%arg0: i32, %arg1: i32) -> (i32, i32) {
    %c0_i32 = arith.constant 0 : i32
    %c0_i32_0 = arith.constant 0 : i32
    return %arg1, %c0_i32 : i32, i32
  }
  func.func @transform_3(%arg0: i32, %arg1: i32) -> (i32, i32) {
    %0 = arith.muli %arg1, %arg0 : i32
    %c0_i32 = arith.constant 0 : i32
    %c0_i32_0 = arith.constant 0 : i32
    return %0, %c0_i32 : i32, i32
  }
}

</mosaic_0001>

<llo_original>
// kernel: tpu_custom_call.1
$region0: #{tpu_custom_call.1}
  #allocation0 [shape = 'u32[]', space=smem, size = 0x4, offset = 0x4, fixed_abs, tag = 'smem constant byte address 0x4 - core index']
  #allocation1 [shape = 'u32[144,128]{1,0:T(1,128)}', space=vmem, size = 0x12000, scoped, tag = 'internal scratch']
  #allocation2 [shape = 'f32[3]{0:T(128)}', space=smem, size = 0x200, scoped, tag = 'scratch operand']
  #allocation3 [shape = 'f32[1]{0:T(128)S(6)}', space=smem, size = 0x200, scoped, tag = 'scoped memory for tpu_custom_call.1']
  #allocation4 [shape = 'f32[1]{0:T(128)S(6)}', space=smem, size = 0x200, scoped, tag = 'scoped memory for tpu_custom_call.1']
  %s0 = inlined_call_operand.<no memory space> [shape: f32[1], index: 0, kind: input, shape index: {}]
  %s1 = inlined_call_operand.<no memory space> [shape: f32[1], index: 1, kind: input, shape index: {}]
  %s2 = inlined_call_operand.hbm [shape: f32[16,128], index: 2, kind: input, shape index: {}]
  %s3 = inlined_call_operand.hbm [shape: f32[16,128], index: 3, kind: output, shape index: {}]
  %s4 = sld [smem:[#allocation0]]
  $region61: #{tpu_custom_call.1} parent=0
    _
  %s6 = ssub.s32 1, %s4
  %s7 = scalar_select 0, %s6, %s4
  %8 = sst [smem:[#allocation3]] %s0
  %9 = sst [smem:[#allocation4]] %s1
  $region1: #{tpu_custom_call.1} parent=0
    #allocation5 [shape = 'u8[8192]{0}', space=vmem, size = 0x2000, scoped, tag = 'input window, operand 2, single buffered']
    #allocation6 [shape = 's32[2]{0}', space=sflag, size = 0x8, scoped, tag = 'scoped memory for tpu_custom_call.1']
    #allocation7 [shape = 's32[2]{0}', space=sflag, size = 0x8, scoped, tag = 'scoped memory for tpu_custom_call.1']
    #allocation8 [shape = 'u8[16384]{0}', space=vmem, size = 0x4000, scoped, tag = 'output window, operand 0']
    %10 = vsyncpa [#allocation6], 0
    %11 = vsyncpa [#allocation7], 0
    %s12 = scalar_lea.sflag [#allocation7], 1
    %13 = vsyncpa %s12, 0
    loop: start=0, step=1, limit=4
    $region2: #{tpu_custom_call.1} parent=1 // loop_pre_header
      _
    $region3: #{tpu_custom_call.1} parent=1 // loop_header
      %s15 = sphi 0, %s19
      %p16 = scmp.ge.s32.totalorder %s15, 4
      %s22 = sphi 0, %s34
      %s23 = sphi 0, %s30
      %s24 = sphi 0, %s22
      %s25 = sphi 0, %s23
      %s26 = sphi 0, %s24
      %s27 = sphi 0, %s25
      %s35 = sphi 0, %s35
      %s37 = sphi 0, %s35
      %s38 = sphi 0, %s37
      %s52 = sphi 0, %s38
      %s56 = sphi 0, %s56
      %s58 = sphi 0, %s56
      %s59 = sphi 0, %s58
      %s73 = sphi 0, %s59
      %s79 = sphi 0, %s81
      %s82 = sphi 0, %s79
      %s83 = sphi 0, %s82
      %s99 = sphi 0, %s83
      %s107 = sphi 0, %s109
      %s110 = sphi 0, %s107
      %s111 = sphi 0, %s110
      %s127 = sphi 0, %s111
    $region4: #{tpu_custom_call.1} parent=1 // loop_header_branch
      %18 = sbr.rel (%p16) target = $region8
    $region5: #{tpu_custom_call.1} parent=1 // loop_body
      %s20 = ssub.s32 %s15, 1
      %s21 = ssub.s32 %s15, 2
      %s28 = sadd.s32 1, %s23
      %p29 = scmp.ge.s32.totalorder %s28, 1
      %s30 = scalar_select %p29, 0, %s28
      %s31 = sadd.s32 1, %s22
      %s32 = scalar_select %p29, %s31, %s22
      %p33 = scmp.ge.s32.totalorder %s32, 2
      %s34 = scalar_select %p33, 0, %s32
      %s36 = sadd.s32 %s35, 1
      %p39 = scmp.eq.s32.totalorder %s15, 1
      %p40 = scmp.ne.s32.totalorder %s35, %s37
      %p41 = scmp.eq.s32.totalorder %s15, 0
      %p42 = por %p40, %p41
      %p43 = scmp.ne.s32.totalorder %s35, %s37
      %p44 = scmp.eq.s32.totalorder %s20, 1
      %p45 = por %p43, %p44
      %p46 = scmp.ne.s32.totalorder %s37, %s38
      %p47 = scmp.eq.s32.totalorder %s20, 0
      %p48 = por %p46, %p47
      %p49 = scmp.ne.s32.totalorder %s37, %s38
      %p50 = scmp.eq.s32.totalorder %s21, 1
      %p51 = por %p49, %p50
      %p53 = scmp.ne.s32.totalorder %s38, %s52
      %p54 = scmp.eq.s32.totalorder %s21, 0
      %p55 = por %p53, %p54
      %s57 = sadd.s32 %s56, 1
      %p60 = scmp.eq.s32.totalorder %s15, 1
      %p61 = scmp.ne.s32.totalorder %s56, %s58
      %p62 = scmp.eq.s32.totalorder %s15, 0
      %p63 = por %p61, %p62
      %p64 = scmp.ne.s32.totalorder %s56, %s58
      %p65 = scmp.eq.s32.totalorder %s20, 1
      %p66 = por %p64, %p65
      %p67 = scmp.ne.s32.totalorder %s58, %s59
      %p68 = scmp.eq.s32.totalorder %s20, 0
      %p69 = por %p67, %p68
      %p70 = scmp.ne.s32.totalorder %s58, %s59
      %p71 = scmp.eq.s32.totalorder %s21, 1
      %p72 = por %p70, %p71
      %p74 = scmp.ne.s32.totalorder %s59, %s73
      %p75 = scmp.eq.s32.totalorder %s21, 0
      %p76 = por %p74, %p75
      %s77 = ssub.s32 %s23, %s30
      %p78 = scmp.eq.s32.totalorder %s77, 0
      %s80 = sadd.s32 %s79, 1
      %s81 = scalar_select %p78, %s79, %s80
      %p84 = pneg %p78
      %p85 = scmp.eq.s32.totalorder %s15, 1
      %p86 = por %p84, %p85
      %p87 = scmp.ne.s32.totalorder %s79, %s82
      %p88 = scmp.eq.s32.totalorder %s15, 0
      %p89 = por %p87, %p88
      %p90 = scmp.ne.s32.totalorder %s79, %s82
      %p91 = scmp.eq.s32.totalorder %s20, 1
      %p92 = por %p90, %p91
      %p93 = scmp.ne.s32.totalorder %s82, %s83
      %p94 = scmp.eq.s32.totalorder %s20, 0
      %p95 = por %p93, %p94
      %p96 = scmp.ne.s32.totalorder %s82, %s83
      %p97 = scmp.eq.s32.totalorder %s21, 1
      %p98 = por %p96, %p97
      %p100 = scmp.ne.s32.totalorder %s83, %s99
      %p101 = scmp.eq.s32.totalorder %s21, 0
      %p102 = por %p100, %p101
      %s103 = smul.u32 %s23, %s22
      %s104 = smul.u32 %s30, %s34
      %s105 = ssub.s32 %s103, %s104
      %p106 = scmp.eq.s32.totalorder %s105, 0
      %s108 = sadd.s32 %s107, 1
      %s109 = scalar_select %p106, %s107, %s108
      %p112 = pneg %p106
      %p113 = scmp.eq.s32.totalorder %s15, 1
      %p114 = por %p112, %p113
      %p115 = scmp.ne.s32.totalorder %s107, %s110
      %p116 = scmp.eq.s32.totalorder %s15, 0
      %p117 = por %p115, %p116
      %p118 = scmp.ne.s32.totalorder %s107, %s110
      %p119 = scmp.eq.s32.totalorder %s20, 1
      %p120 = por %p118, %p119
      %p121 = scmp.ne.s32.totalorder %s110, %s111
      %p122 = scmp.eq.s32.totalorder %s20, 0
      %p123 = por %p121, %p122
      %p124 = scmp.ne.s32.totalorder %s110, %s111
      %p125 = scmp.eq.s32.totalorder %s21, 1
      %p126 = por %p124, %p125
      %p128 = scmp.ne.s32.totalorder %s111, %s127
      %p129 = scmp.eq.s32.totalorder %s21, 0
      %p130 = por %p128, %p129
      %p131 = scmp.le.s32.totalorder 1, %s15
      %p132 = scmp.lt.s32.totalorder %s15, 3
      %p133 = pnand %p131, %p132
      %p134 = pneg %p133
      // Predicated region
      $region9: #{tpu_custom_call.1} parent=5 // pred_check
        _
      $region10: #{tpu_custom_call.1} parent=5 // pred_check_branch
        %136 = sbr.rel (%p133) target = $region12
      $region11: #{tpu_custom_call.1} parent=5 // pred_region
        %s137 = ssub.s32 %s15, 1
        // Predicated region
        $region13: #{tpu_custom_call.1} parent=11 // pred_check
          %p138 = pneg %p48
        $region14: #{tpu_custom_call.1} parent=11 // pred_check_branch
          %140 = sbr.rel (%p138) target = $region16
        $region15: #{tpu_custom_call.1} parent=11 // pred_region
          _
        $region16: #{tpu_custom_call.1} parent=11 // pred_fallthru
          _
        // Predicated region
        $region17: #{tpu_custom_call.1} parent=11 // pred_check
          %p141 = pneg %p69
        $region18: #{tpu_custom_call.1} parent=11 // pred_check_branch
          %143 = sbr.rel (%p141) target = $region20
        $region19: #{tpu_custom_call.1} parent=11 // pred_region
          _
        $region20: #{tpu_custom_call.1} parent=11 // pred_fallthru
          _
        // Predicated region
        $region21: #{tpu_custom_call.1} parent=11 // pred_check
          %p144 = pneg %p95
        $region22: #{tpu_custom_call.1} parent=11 // pred_check_branch
          %146 = sbr.rel (%p144) target = $region24
        $region23: #{tpu_custom_call.1} parent=11 // pred_region
          %s147 = smul.u32 2, %s25
          %s149 = ssub.s32 256, 256
          %150 = vsyncadd [#allocation6], %s149
          %s151 = smul.addr %s147, 128
          %s152 = scalar_lea.hbm %s2, %s151
          %s153 = sshll.u32 [#allocation5], 4
          %s154 = int_to_ptr.vmem [resolvable:$true] %s153
          %159 = dma.hbm_to_vmem [thread:$0]  %s152, 256, %s154, [#allocation6], 128, 128, 8
        $region24: #{tpu_custom_call.1} parent=11 // pred_fallthru
          _
      $region12: #{tpu_custom_call.1} parent=5 // pred_fallthru
        _
      %p160 = scmp.lt.s32.totalorder %s15, 2
      // Predicated region
      $region25: #{tpu_custom_call.1} parent=5 // pred_check
        %p161 = pneg %p160
      $region26: #{tpu_custom_call.1} parent=5 // pred_check_branch
        %163 = sbr.rel (%p161) target = $region28
      $region27: #{tpu_custom_call.1} parent=5 // pred_region
        _
      $region28: #{tpu_custom_call.1} parent=5 // pred_fallthru
        _
      %p164 = scmp.le.s32.totalorder 1, %s15
      %p165 = scmp.lt.s32.totalorder %s15, 3
      %p166 = pnand %p164, %p165
      %p167 = pneg %p166
      // Predicated region
      $region29: #{tpu_custom_call.1} parent=5 // pred_check
        _
      $region30: #{tpu_custom_call.1} parent=5 // pred_check_branch
        %169 = sbr.rel (%p166) target = $region32
      $region31: #{tpu_custom_call.1} parent=5 // pred_region
        %s170 = ssub.s32 %s15, 1
        // Predicated region
        $region33: #{tpu_custom_call.1} parent=31 // pred_check
          %p171 = pneg %p95
        $region34: #{tpu_custom_call.1} parent=31 // pred_check_branch
          %173 = sbr.rel (%p171) target = $region36
        $region35: #{tpu_custom_call.1} parent=31 // pred_region
          %174 = dma.done [#allocation6], 256
        $region36: #{tpu_custom_call.1} parent=31 // pred_fallthru
          _
        %p175 = pneg %p48
        %p176 = pneg %p45
        %p177 = pneg %p69
        %p178 = pneg %p66
        %p179 = pneg %p95
        %p180 = pneg %p92
        %p181 = pneg %p123
        %p182 = pneg %p120
        %s183 = sand.u32 %s110, 1
        %s184 = scalar_lea.sflag [#allocation7], %s183
        %s185 = sand.u32 %s110, 1
        %s186 = smul.addr %s185, 16
        %s187 = scalar_lea.vmem [#allocation8], %s186
        %s188 = smul.u32 2, %s25
        %s189 = smul.u32 %s25, %s24
        %s190 = smul.u32 2, %s189
        %s191 = sld [smem:[#allocation3]]
        %s192 = sld [smem:[#allocation4]]
        %s193 = smin.f32 %s192, 0.0
        %s194 = smax.f32 %s191, 0.0
        %s195 = ssub.f32 %s194, %s193
        %p196 = scmp.eq.f32.partialorder %s195, 0.0
        %s197 = scalar_select %p196, 15.0, %s195
        %v198 = vstv %s197
        %v199 = vrcp.pop %v198
        %s200 = vtos %v199
        %s201 = smul.f32 15.0, %s200
        %v202 = vstv %s201
        %v203 = vrcp.pop %v202
        %s204 = vtos %v203
        %s205 = smul.f32 %s201, %s193
        %v206 = vld [vmem:[#allocation5] sm:$0xff]
        %v207 = vld [vmem:[#allocation5 + $0x8] sm:$0xff]
        %v208 = vstv %s191
        %vm209 = vcmp.gt.f32.partialorder %v206, %v208
        %vm210 = vcmp.gt.f32.partialorder %v207, %v208
        %v211 = vsel %vm209, %v208, %v206
        %v212 = vsel %vm210, %v208, %v207
        %v213 = vstv %s192
        %vm214 = vcmp.lt.f32.partialorder %v211, %v213
        %vm215 = vcmp.lt.f32.partialorder %v212, %v213
        %v216 = vsel %vm214, %v213, %v211
        %v217 = vsel %vm215, %v213, %v212
        %v218 = vstv %s201
        %v219 = vmul.f32 %v218, %v216
        %v220 = vmul.f32 %v218, %v217
        %v221 = vstv %s205
        %v222 = vsub.f32 %v219, %v221
        %v223 = vsub.f32 %v220, %v221
        %v224 = vround.ne.pseudo %v222
        %v225 = vround.ne.pseudo %v223
        %v226 = vmul.f32 %v224, 0.25
        %v227 = vmul.f32 %v225, 0.25
        %v228 = vfloor.f32 %v226
        %v229 = vfloor.f32 %v227
        %v230 = vmul.f32 %v228, 4.0
        %v231 = vmul.f32 %v229, 4.0
        %v232 = vadd.f32 %v230, %v221
        %v233 = vadd.f32 %v231, %v221
        %v234 = vstv %s204
        %v235 = vmul.f32 %v232, %v234
        %v236 = vmul.f32 %v233, %v234
        %p237 = scmp.eq.s32.totalorder %s24, 0
        %p238 = scmp.eq.s32.totalorder %s25, 0
        %p239 = pnand %p237, %p238
        %p240 = pneg %p239
        // Predicated region
        $region37: #{tpu_custom_call.1} parent=31 // pred_check
          _
        $region38: #{tpu_custom_call.1} parent=31 // pred_check_branch
          %242 = sbr.rel (%p239) target = $region40
        $region39: #{tpu_custom_call.1} parent=31 // pred_region
          %s243 = scalar_lea.smem [#allocation2], 0
          %244 = sst [smem:[%s243]] 0.0
          %s245 = scalar_lea.smem [#allocation2], 1
          %246 = sst [smem:[%s245]] 0.0
          %s247 = scalar_lea.smem [#allocation2], 2
          %248 = sst [smem:[%s247]] 0.0
        $region40: #{tpu_custom_call.1} parent=31 // pred_fallthru
          _
        // Predicated region
        $region41: #{tpu_custom_call.1} parent=31 // pred_check
          %p249 = pneg %p237
        $region42: #{tpu_custom_call.1} parent=31 // pred_check_branch
          %251 = sbr.rel (%p249) target = $region44
        $region43: #{tpu_custom_call.1} parent=31 // pred_region
          %v252 = vadd.f32 %v224, %v221
          %v253 = vadd.f32 %v225, %v221
          %v254 = vmul.f32 %v252, %v234
          %v255 = vmul.f32 %v253, %v234
          %s256 = sld [smem:[#allocation2]]
          %v257 = vadd.f32 %v206, %v207
          %258 = vadd.xlane.f32.xlu0 %v257
          %v259 = vpop.xlane.xlu0 %258
          %v260 = vrot.slane %v259, 4
          %v261 = vadd.f32 %v259, %v260
          %v262 = vrot.slane %v261, 2
          %v263 = vadd.f32 %v261, %v262
          %v264 = vrot.slane %v263, 1
          %v265 = vadd.f32 %v263, %v264
          %s266 = vtos %v265
          %s267 = sadd.f32 %s256, %s266
          %s268 = scalar_lea.smem [#allocation2], 0
          %269 = sst [smem:[%s268]] %s267
          %s270 = sld [smem:[#allocation2 + $0x1]]
          %v271 = vadd.f32 %v254, %v255
          %272 = vadd.xlane.f32.xlu0 %v271
          %v273 = vpop.xlane.xlu0 %272
          %v274 = vrot.slane %v273, 4
          %v275 = vadd.f32 %v273, %v274
          %v276 = vrot.slane %v275, 2
          %v277 = vadd.f32 %v275, %v276
          %v278 = vrot.slane %v277, 1
          %v279 = vadd.f32 %v277, %v278
          %s280 = vtos %v279
          %s281 = sadd.f32 %s270, %s280
          %s282 = scalar_lea.smem [#allocation2], 1
          %283 = sst [smem:[%s282]] %s281
          %s284 = sld [smem:[#allocation2 + $0x2]]
          %v285 = vadd.f32 %v235, %v236
          %286 = vadd.xlane.f32.xlu0 %v285
          %v287 = vpop.xlane.xlu0 %286
          %v288 = vrot.slane %v287, 4
          %v289 = vadd.f32 %v287, %v288
          %v290 = vrot.slane %v289, 2
          %v291 = vadd.f32 %v289, %v290
          %v292 = vrot.slane %v291, 1
          %v293 = vadd.f32 %v291, %v292
          %s294 = vtos %v293
          %s295 = sadd.f32 %s284, %s294
          %s296 = scalar_lea.smem [#allocation2], 2
          %297 = sst [smem:[%s296]] %s295
        $region44: #{tpu_custom_call.1} parent=31 // pred_fallthru
          _
        %p298 = scmp.eq.s32.totalorder %s24, 1
        // Predicated region
        $region45: #{tpu_custom_call.1} parent=31 // pred_check
          %p299 = pneg %p298
        $region46: #{tpu_custom_call.1} parent=31 // pred_check_branch
          %301 = sbr.rel (%p299) target = $region48
        $region47: #{tpu_custom_call.1} parent=31 // pred_region
          %s302 = sld [smem:[#allocation2 + $0x1]]
          %s303 = smul.f32 %s302, 0.00048828125
          %s304 = sld [smem:[#allocation2 + $0x2]]
          %s305 = smul.f32 %s304, 0.00048828125
          %p306 = scmp.ne.f32.partialorder %s305, 0.0
          %v307 = vstv %s305
          %v308 = vrcp.pop %v307
          %s309 = vtos %v308
          %s310 = smul.f32 %s303, %s309
          %s311 = scalar_select %p306, %s310, 1.0
          %v312 = vstv %s311
          %v313 = vmul.f32 %v235, %v312
          %v314 = vmul.f32 %v236, %v312
          %315 = vst [vmem:[%s187] sm:$0xff] %v313
          %316 = vst [vmem:[%s187 + $0x8] sm:$0xff] %v314
        $region48: #{tpu_custom_call.1} parent=31 // pred_fallthru
          _
        %s317 = sand.u32 %s110, 1
        %s318 = scalar_lea.sflag [#allocation7], %s317
        %s319 = sand.u32 %s110, 1
        %s320 = smul.addr %s319, 16
        %s321 = scalar_lea.vmem [#allocation8], %s320
        // Predicated region
        $region49: #{tpu_custom_call.1} parent=31 // pred_check
          %p322 = pneg %p120
        $region50: #{tpu_custom_call.1} parent=31 // pred_check_branch
          %324 = sbr.rel (%p322) target = $region52
        $region51: #{tpu_custom_call.1} parent=31 // pred_region
          %s325 = smul.u32 %s25, %s24
          %s326 = smul.u32 2, %s325
          %s328 = ssub.s32 256, 256
          %329 = vsyncadd %s318, %s328
          %s330 = smul.addr %s326, 128
          %s331 = scalar_lea.hbm %s3, %s330
          %s332 = sshll.u32 %s321, 4
          %s333 = int_to_ptr.vmem [resolvable:$true] %s332
          %338 = dma.vmem_to_hbm [thread:$0]  %s333, 256, %s331, %s318, 128, 128, 8
        $region52: #{tpu_custom_call.1} parent=31 // pred_fallthru
          _
      $region32: #{tpu_custom_call.1} parent=5 // pred_fallthru
        _
      %p339 = scmp.le.s32.totalorder 2, %s15
      // Predicated region
      $region53: #{tpu_custom_call.1} parent=5 // pred_check
        %p340 = pneg %p339
      $region54: #{tpu_custom_call.1} parent=5 // pred_check_branch
        %342 = sbr.rel (%p340) target = $region56
      $region55: #{tpu_custom_call.1} parent=5 // pred_region
        %s343 = ssub.s32 %s15, 2
        // Predicated region
        $region57: #{tpu_custom_call.1} parent=55 // pred_check
          %p344 = pneg %p126
        $region58: #{tpu_custom_call.1} parent=55 // pred_check_branch
          %346 = sbr.rel (%p344) target = $region60
        $region59: #{tpu_custom_call.1} parent=55 // pred_region
          %s347 = sand.u32 %s111, 1
          %s348 = scalar_lea.sflag [#allocation7], %s347
          %s349 = sand.u32 %s111, 1
          %s350 = smul.addr %s349, 16
          %s351 = scalar_lea.vmem [#allocation8], %s350
          %352 = dma.done %s348, 256
        $region60: #{tpu_custom_call.1} parent=55 // pred_fallthru
          _
      $region56: #{tpu_custom_call.1} parent=5 // pred_fallthru
        _
    $region6: #{tpu_custom_call.1} parent=1 // loop_footer
      %s19 = sadd.s32 1, %s15
    $region7: #{tpu_custom_call.1} parent=1 // loop_footer_branch
      %14 = sbr.rel target = $region3
    $region8: #{tpu_custom_call.1} parent=1 // loop_exit
      _
    %353 = vsyncpa [#allocation6], 1
    %s354 = scalar_lea.sflag [#allocation6], 1
    %355 = vsyncpa %s354, 1
    %356 = vsyncpa [#allocation7], 1
    %s357 = scalar_lea.sflag [#allocation7], 1
    %358 = vsyncpa %s357, 1

</llo_original>
